<compile_context>
chip_gen: v6e
topology: v6e:2x2x1
jax: 0.10.0
libtpu: 0.0.40
codegen_flags: <defaults>
</compile_context>

<pallas_src>
import jax
import jax.numpy as jnp
from jax.experimental import pallas as pl
from jax.experimental.pallas import tpu as pltpu
import numpy as np


def triplane_kernel(pts_ref, xyxz_t_ref, yz_t_ref, out_ref):
    R = yz_t_ref.shape[0]
    n = pts_ref.shape[1]

    # c = clip((p + 1) / 2 * (R - 1), 0, R - 1); layout (3, n): xyz on
    # sublanes, point index on lanes (lane-dense).
    c = (pts_ref[...] + 1.0) * (0.5 * float(R - 1))
    c = jnp.clip(c, 0.0, float(R - 1))
    x = c[0:1, :]                                        # (1, n)
    y = c[1:2, :]
    z = c[2:3, :]

    # Grid-row value on sublanes, point on lanes (built once per step).
    row_f = jax.lax.broadcasted_iota(jnp.int32, (R, n), 0).astype(jnp.float32)

    def hat(coord):
        """Bilinear 'hat' weights: (1-frac) at floor, frac at ceil, 0 elsewhere."""
        return jnp.maximum(1.0 - jnp.abs(row_f - coord), 0.0)   # (R, n)

    wx = hat(x)
    wy = hat(y)
    wz = hat(z)

    # Row gather+lerp as MXU matmuls with lane-dense minor dim n.
    # xyxz_t_ref = [xy_plane^T ; xz_plane^T] (both share wx) -> one matmul.
    g = jnp.dot(xyxz_t_ref[...], wx,
                preferred_element_type=jnp.float32)      # (2R, n)
    g_xy = g[:R, :]                                      # (R, n), aligned slice
    g_xz = g[R:, :]
    g_yz = jnp.dot(yz_t_ref[...], wy,
                   preferred_element_type=jnp.float32)   # (R, n)

    # Fused column weighting + single sublane reduction.
    acc = g_xy * wy + (g_xz + g_yz) * wz                 # (R, n)
    out_ref[...] = jnp.sum(acc, axis=0, keepdims=True)   # (1, n), lane-dense


def triplane_forward(points, xy_plane, yz_plane, xz_plane, *, tile_n=512):
    """points: (N, 3) float32 in [-1, 1]; planes: (R, R) float32. Returns (N, 1)."""
    N = points.shape[0]
    R = xy_plane.shape[0]
    assert tile_n % 128 == 0, "tile_n must be a multiple of 128 lanes"

    n_blocks = pl.cdiv(N, tile_n)
    n_pad = n_blocks * tile_n

    # Layout plumbing (outside the kernel): points -> (3, N) lane-dense,
    # padded to a multiple of tile_n; planes transposed once and the two
    # wx-sharing planes stacked so the kernel needs only 2 matmuls.
    pts_t = jnp.asarray(points, jnp.float32).T           # (3, N)
    if n_pad != N:
        pts_t = jnp.pad(pts_t, ((0, 0), (0, n_pad - N)))

    xyxz_t = jnp.concatenate(
        [jnp.asarray(xy_plane, jnp.float32).T,
         jnp.asarray(xz_plane, jnp.float32).T], axis=0)  # (2R, R)
    yz_t = jnp.asarray(yz_plane, jnp.float32).T          # (R, R)

    out_row = pl.pallas_call(
        triplane_kernel,
        out_shape=jax.ShapeDtypeStruct((1, n_pad), jnp.float32),
        grid_spec=pltpu.PrefetchScalarGridSpec(
            num_scalar_prefetch=0,
            grid=(n_blocks,),
            in_specs=[
                pl.BlockSpec((3, tile_n), lambda i: (0, i)),    # points block
                pl.BlockSpec((2 * R, R), lambda i: (0, 0)),     # [xy^T; xz^T]
                pl.BlockSpec((R, R), lambda i: (0, 0)),         # yz^T
            ],
            out_specs=pl.BlockSpec((1, tile_n), lambda i: (0, i)),
        ),
        compiler_params=pltpu.CompilerParams(
            dimension_semantics=("parallel",)),
    )(pts_t, xyxz_t, yz_t)

    return out_row[:, :N].reshape(N, 1)                  # matches F.unsqueeze(-1)


def triplane_ref(points, xy_plane, yz_plane, xz_plane):
    """Pure-JAX reference matching the PyTorch forward exactly."""
    R = xy_plane.shape[0]
    p = (points + 1.0) / 2.0 * (R - 1)
    x, y, z = p[:, 0], p[:, 1], p[:, 2]

    def interpolate(plane, c1, c2):
        c1f = jnp.floor(c1).astype(jnp.int32)
        c2f = jnp.floor(c2).astype(jnp.int32)
        c1c = jnp.minimum(c1f + 1, R - 1)
        c2c = jnp.minimum(c2f + 1, R - 1)
        bl = plane[c1f, c2f]
        br = plane[c1c, c2f]
        tl = plane[c1f, c2c]
        tr = plane[c1c, c2c]
        h = c1 - c1f.astype(jnp.float32)
        v = c2 - c2f.astype(jnp.float32)
        top = tl + (tr - tl) * h
        bottom = bl + (br - bl) * h
        return bottom + (top - bottom) * v

    F = (interpolate(xy_plane, x, y)
         + interpolate(yz_plane, y, z)
         + interpolate(xz_plane, x, z))
    return F[:, None]


if __name__ == "__main__":
    resolution = 16
    N = 4096            # 8 even grid steps of 512 -> both v7x TCs stay busy
    tile_n = 512

    key = jax.random.PRNGKey(0)
    k_xy, k_yz, k_xz, k_pts = jax.random.split(key, 4)

    # Deterministic "randn"-style parameter init (matches torch.randn shapes).
    xy_plane = jax.random.normal(k_xy, (resolution, resolution), jnp.float32)
    yz_plane = jax.random.normal(k_yz, (resolution, resolution), jnp.float32)
    xz_plane = jax.random.normal(k_xz, (resolution, resolution), jnp.float32)

    # Query points in [-1, 1), shape (N, 3) like the PyTorch forward expects.
    points = jax.random.uniform(k_pts, (N, 3), jnp.float32,
                                minval=-1.0, maxval=1.0)

    out = triplane_forward(points, xy_plane, yz_plane, xz_plane, tile_n=tile_n)
    out = jax.block_until_ready(out)

    ref = triplane_ref(points, xy_plane, yz_plane, xz_plane)
    np.testing.assert_allclose(np.asarray(out), np.asarray(ref),
                               rtol=1e-5, atol=1e-5)

    print("KERNEL_OK")
</pallas_src>

<mosaic_0001>
module attributes {stable_mosaic.version = 11 : i64} {
  func.func @triplane_kernel(%arg0: i32, %arg1: memref<3x512xf32, #tpu.memory_space<vmem>>, %arg2: memref<32x16xf32, #tpu.memory_space<vmem>>, %arg3: memref<16x16xf32, #tpu.memory_space<vmem>>, %arg4: memref<1x512xf32, #tpu.memory_space<vmem>>) attributes {dimension_semantics = [#tpu.dimension_semantics<parallel>], iteration_bounds = array<i64: 8>, scalar_prefetch = 0 : i64, scratch_operands = 0 : i64, tpu.core_type = #tpu.core_type<tc>, window_params = [{transform_indices = @transform_0, window_bounds = array<i64: 3, 512>}, {pipeline_mode = #tpu.pipeline_mode<synchronous>, transform_indices = @transform_1, window_bounds = array<i64: 32, 16>}, {pipeline_mode = #tpu.pipeline_mode<synchronous>, transform_indices = @transform_2, window_bounds = array<i64: 16, 16>}, {transform_indices = @transform_3, window_bounds = array<i64: 1, 512>}]} {
    %c0 = arith.constant 0 : index
    %c0_0 = arith.constant 0 : index
    %0 = vector.load %arg1[%c0, %c0_0] : memref<3x512xf32, #tpu.memory_space<vmem>>, vector<3x512xf32>
    %cst = arith.constant 1.000000e+00 : f32
    %1 = vector.broadcast %cst : f32 to vector<3x512xf32>
    %2 = arith.addf %0, %1 : vector<3x512xf32>
    %cst_1 = arith.constant 7.500000e+00 : f32
    %3 = vector.broadcast %cst_1 : f32 to vector<3x512xf32>
    %4 = arith.mulf %2, %3 : vector<3x512xf32>
    %cst_2 = arith.constant 0.000000e+00 : f32
    %cst_3 = arith.constant 1.500000e+01 : f32
    %5 = vector.broadcast %cst_2 : f32 to vector<3x512xf32>
    %6 = arith.maximumf %5, %4 : vector<3x512xf32>
    %7 = vector.broadcast %cst_3 : f32 to vector<3x512xf32>
    %8 = arith.minimumf %7, %6 : vector<3x512xf32>
    %9 = vector.extract_strided_slice %8 {offsets = [0, 0], sizes = [1, 512], strides = [1, 1]} : vector<3x512xf32> to vector<1x512xf32>
    %10 = vector.extract_strided_slice %8 {offsets = [1, 0], sizes = [1, 512], strides = [1, 1]} : vector<3x512xf32> to vector<1x512xf32>
    %11 = vector.extract_strided_slice %8 {offsets = [2, 0], sizes = [1, 512], strides = [1, 1]} : vector<3x512xf32> to vector<1x512xf32>
    %12 = tpu.iota {dimensions = array<i32: 0>} : vector<16x512xi32>
    %13 = arith.sitofp %12 : vector<16x512xi32> to vector<16x512xf32>
    %14 = vector.broadcast %9 : vector<1x512xf32> to vector<16x512xf32>
    %15 = arith.subf %13, %14 : vector<16x512xf32>
    %16 = math.absf %15 : vector<16x512xf32>
    %cst_4 = arith.constant 1.000000e+00 : f32
    %17 = vector.broadcast %cst_4 : f32 to vector<16x512xf32>
    %18 = arith.subf %17, %16 : vector<16x512xf32>
    %cst_5 = arith.constant 0.000000e+00 : f32
    %19 = vector.broadcast %cst_5 : f32 to vector<16x512xf32>
    %20 = arith.maximumf %18, %19 : vector<16x512xf32>
    %21 = vector.broadcast %10 : vector<1x512xf32> to vector<16x512xf32>
    %22 = arith.subf %13, %21 : vector<16x512xf32>
    %23 = math.absf %22 : vector<16x512xf32>
    %cst_6 = arith.constant 1.000000e+00 : f32
    %24 = vector.broadcast %cst_6 : f32 to vector<16x512xf32>
    %25 = arith.subf %24, %23 : vector<16x512xf32>
    %cst_7 = arith.constant 0.000000e+00 : f32
    %26 = vector.broadcast %cst_7 : f32 to vector<16x512xf32>
    %27 = arith.maximumf %25, %26 : vector<16x512xf32>
    %28 = vector.broadcast %11 : vector<1x512xf32> to vector<16x512xf32>
    %29 = arith.subf %13, %28 : vector<16x512xf32>
    %30 = math.absf %29 : vector<16x512xf32>
    %cst_8 = arith.constant 1.000000e+00 : f32
    %31 = vector.broadcast %cst_8 : f32 to vector<16x512xf32>
    %32 = arith.subf %31, %30 : vector<16x512xf32>
    %cst_9 = arith.constant 0.000000e+00 : f32
    %33 = vector.broadcast %cst_9 : f32 to vector<16x512xf32>
    %34 = arith.maximumf %32, %33 : vector<16x512xf32>
    %c0_10 = arith.constant 0 : index
    %c0_11 = arith.constant 0 : index
    %35 = vector.load %arg2[%c0_10, %c0_11] : memref<32x16xf32, #tpu.memory_space<vmem>>, vector<32x16xf32>
    %cst_12 = arith.constant dense<0.000000e+00> : vector<32x512xf32>
    %36 = tpu.matmul %35, %20, %cst_12 {dimension_numbers = #tpu.dot_dimension_numbers<[1], [0], [0], [1], [0, 0, 1, 1], [], []>} : vector<32x16xf32>, vector<16x512xf32>, vector<32x512xf32> -> vector<32x512xf32>
    %37 = vector.extract_strided_slice %36 {offsets = [0, 0], sizes = [16, 512], strides = [1, 1]} : vector<32x512xf32> to vector<16x512xf32>
    %38 = vector.extract_strided_slice %36 {offsets = [16, 0], sizes = [16, 512], strides = [1, 1]} : vector<32x512xf32> to vector<16x512xf32>
    %c0_13 = arith.constant 0 : index
    %c0_14 = arith.constant 0 : index
    %39 = vector.load %arg3[%c0_13, %c0_14] : memref<16x16xf32, #tpu.memory_space<vmem>>, vector<16x16xf32>
    %cst_15 = arith.constant dense<0.000000e+00> : vector<16x512xf32>
    %40 = tpu.matmul %39, %27, %cst_15 {dimension_numbers = #tpu.dot_dimension_numbers<[1], [0], [0], [1], [0, 0, 1, 1], [], []>} : vector<16x16xf32>, vector<16x512xf32>, vector<16x512xf32> -> vector<16x512xf32>
    %41 = arith.mulf %37, %27 : vector<16x512xf32>
    %42 = arith.addf %38, %40 : vector<16x512xf32>
    %43 = arith.mulf %42, %34 : vector<16x512xf32>
    %44 = arith.addf %41, %43 : vector<16x512xf32>
    %cst_16 = arith.constant dense<0.000000e+00> : vector<512xf32>
    %45 = vector.multi_reduction <add>, %44, %cst_16 [0] : vector<16x512xf32> to vector<512xf32>
    %46 = vector.shape_cast %45 : vector<512xf32> to vector<1x512xf32>
    %c0_17 = arith.constant 0 : index
    %c0_18 = arith.constant 0 : index
    %47 = vector.load %arg4[%c0_17, %c0_18] : memref<1x512xf32, #tpu.memory_space<vmem>>, vector<1x512xf32>
    tpu.vector_store %arg4[%c0_17, %c0_18], %46 {strides = array<i32>} : memref<1x512xf32, #tpu.memory_space<vmem>>, vector<1x512xf32>,
    return
  }
  func.func @transform_0(%arg0: i32) -> (i32, i32) {
    %c0_i32 = arith.constant 0 : i32
    %c0_i32_0 = arith.constant 0 : i32
    return %c0_i32, %arg0 : i32, i32
  }
  func.func @transform_1(%arg0: i32) -> (i32, i32) {
    %c0_i32 = arith.constant 0 : i32
    %c0_i32_0 = arith.constant 0 : i32
    %c0_i32_1 = arith.constant 0 : i32
    return %c0_i32, %c0_i32_0 : i32, i32
  }
  func.func @transform_2(%arg0: i32) -> (i32, i32) {
    %c0_i32 = arith.constant 0 : i32
    %c0_i32_0 = arith.constant 0 : i32
    %c0_i32_1 = arith.constant 0 : i32
    return %c0_i32, %c0_i32_0 : i32, i32
  }
  func.func @transform_3(%arg0: i32) -> (i32, i32) {
    %c0_i32 = arith.constant 0 : i32
    %c0_i32_0 = arith.constant 0 : i32
    return %c0_i32, %arg0 : i32, i32
  }
}

</mosaic_0001>

<llo_original>
// kernel: tpu_custom_call.1
$region0: #{tpu_custom_call.1}
  #allocation0 [shape = 'u32[]', space=smem, size = 0x4, offset = 0x4, fixed_abs, tag = 'smem constant byte address 0x4 - core index']
  #allocation1 [shape = 'u32[144,128]{1,0:T(1,128)}', space=vmem, size = 0x12000, scoped, tag = 'internal scratch']
  %s0 = inlined_call_operand.hbm [shape: f32[3,4096], index: 0, kind: input, shape index: {}]
  %s1 = inlined_call_operand.vmem [shape: f32[32,16], index: 1, kind: input, shape index: {}]
  %s2 = inlined_call_operand.vmem [shape: f32[16,16], index: 2, kind: input, shape index: {}]
  %s3 = inlined_call_operand.hbm [shape: f32[1,4096], index: 3, kind: output, shape index: {}]
  %s4 = sld [smem:[#allocation0]]
  $region49: #{tpu_custom_call.1} parent=0
    _
  %s6 = ssub.s32 1, %s4
  %s7 = scalar_select 0, %s6, %s4
  $region1: #{tpu_custom_call.1} parent=0
    #allocation2 [shape = 'u8[16384]{0}', space=vmem, size = 0x4000, scoped, tag = 'input window, operand 0']
    #allocation3 [shape = 's32[2]{0}', space=sflag, size = 0x8, scoped, tag = 'scoped memory for tpu_custom_call.1']
    #allocation4 [shape = 's32[2]{0}', space=sflag, size = 0x8, scoped, tag = 'scoped memory for tpu_custom_call.1']
    #allocation5 [shape = 'u8[4096]{0}', space=vmem, size = 0x1000, scoped, tag = 'output window, operand 0']
    %8 = vsyncpa [#allocation3], 0
    %s9 = scalar_lea.sflag [#allocation3], 1
    %10 = vsyncpa %s9, 0
    %11 = vsyncpa [#allocation4], 0
    %s12 = scalar_lea.sflag [#allocation4], 1
    %13 = vsyncpa %s12, 0
    loop: start=0, step=1, limit=10
    $region2: #{tpu_custom_call.1} parent=1 // loop_pre_header
      _
    $region3: #{tpu_custom_call.1} parent=1 // loop_header
      %s15 = sphi 0, %s19
      %p16 = scmp.ge.s32.totalorder %s15, 10
      %s25 = sphi 0, %s27
      %s28 = sphi 0, %s25
      %s29 = sphi 0, %s28
      %s45 = sphi 0, %s29
      %s49 = sphi 0, %s49
      %s51 = sphi 0, %s49
      %s52 = sphi 0, %s51
      %s66 = sphi 0, %s52
      %s70 = sphi 0, %s70
      %s72 = sphi 0, %s70
      %s73 = sphi 0, %s72
      %s87 = sphi 0, %s73
      %s93 = sphi 0, %s95
      %s96 = sphi 0, %s93
      %s97 = sphi 0, %s96
      %s113 = sphi 0, %s97
    $region4: #{tpu_custom_call.1} parent=1 // loop_header_branch
      %18 = sbr.rel (%p16) target = $region8
    $region5: #{tpu_custom_call.1} parent=1 // loop_body
      %s20 = ssub.s32 %s15, 1
      %s21 = ssub.s32 %s15, 2
      %s22 = sadd.s32 %s15, 1
      %s23 = ssub.s32 %s15, %s22
      %p24 = scmp.eq.s32.totalorder %s23, 0
      %s26 = sadd.s32 %s25, 1
      %s27 = scalar_select %p24, %s25, %s26
      %p30 = pneg %p24
      %p31 = scmp.eq.s32.totalorder %s15, 7
      %p32 = por %p30, %p31
      %p33 = scmp.ne.s32.totalorder %s25, %s28
      %p34 = scmp.eq.s32.totalorder %s15, 0
      %p35 = por %p33, %p34
      %p36 = scmp.ne.s32.totalorder %s25, %s28
      %p37 = scmp.eq.s32.totalorder %s20, 7
      %p38 = por %p36, %p37
      %p39 = scmp.ne.s32.totalorder %s28, %s29
      %p40 = scmp.eq.s32.totalorder %s20, 0
      %p41 = por %p39, %p40
      %p42 = scmp.ne.s32.totalorder %s28, %s29
      %p43 = scmp.eq.s32.totalorder %s21, 7
      %p44 = por %p42, %p43
      %p46 = scmp.ne.s32.totalorder %s29, %s45
      %p47 = scmp.eq.s32.totalorder %s21, 0
      %p48 = por %p46, %p47
      %s50 = sadd.s32 %s49, 1
      %p53 = scmp.eq.s32.totalorder %s15, 7
      %p54 = scmp.ne.s32.totalorder %s49, %s51
      %p55 = scmp.eq.s32.totalorder %s15, 0
      %p56 = por %p54, %p55
      %p57 = scmp.ne.s32.totalorder %s49, %s51
      %p58 = scmp.eq.s32.totalorder %s20, 7
      %p59 = por %p57, %p58
      %p60 = scmp.ne.s32.totalorder %s51, %s52
      %p61 = scmp.eq.s32.totalorder %s20, 0
      %p62 = por %p60, %p61
      %p63 = scmp.ne.s32.totalorder %s51, %s52
      %p64 = scmp.eq.s32.totalorder %s21, 7
      %p65 = por %p63, %p64
      %p67 = scmp.ne.s32.totalorder %s52, %s66
      %p68 = scmp.eq.s32.totalorder %s21, 0
      %p69 = por %p67, %p68
      %s71 = sadd.s32 %s70, 1
      %p74 = scmp.eq.s32.totalorder %s15, 7
      %p75 = scmp.ne.s32.totalorder %s70, %s72
      %p76 = scmp.eq.s32.totalorder %s15, 0
      %p77 = por %p75, %p76
      %p78 = scmp.ne.s32.totalorder %s70, %s72
      %p79 = scmp.eq.s32.totalorder %s20, 7
      %p80 = por %p78, %p79
      %p81 = scmp.ne.s32.totalorder %s72, %s73
      %p82 = scmp.eq.s32.totalorder %s20, 0
      %p83 = por %p81, %p82
      %p84 = scmp.ne.s32.totalorder %s72, %s73
      %p85 = scmp.eq.s32.totalorder %s21, 7
      %p86 = por %p84, %p85
      %p88 = scmp.ne.s32.totalorder %s73, %s87
      %p89 = scmp.eq.s32.totalorder %s21, 0
      %p90 = por %p88, %p89
      %s91 = ssub.s32 %s15, %s22
      %p92 = scmp.eq.s32.totalorder %s91, 0
      %s94 = sadd.s32 %s93, 1
      %s95 = scalar_select %p92, %s93, %s94
      %p98 = pneg %p92
      %p99 = scmp.eq.s32.totalorder %s15, 7
      %p100 = por %p98, %p99
      %p101 = scmp.ne.s32.totalorder %s93, %s96
      %p102 = scmp.eq.s32.totalorder %s15, 0
      %p103 = por %p101, %p102
      %p104 = scmp.ne.s32.totalorder %s93, %s96
      %p105 = scmp.eq.s32.totalorder %s20, 7
      %p106 = por %p104, %p105
      %p107 = scmp.ne.s32.totalorder %s96, %s97
      %p108 = scmp.eq.s32.totalorder %s20, 0
      %p109 = por %p107, %p108
      %p110 = scmp.ne.s32.totalorder %s96, %s97
      %p111 = scmp.eq.s32.totalorder %s21, 7
      %p112 = por %p110, %p111
      %p114 = scmp.ne.s32.totalorder %s97, %s113
      %p115 = scmp.eq.s32.totalorder %s21, 0
      %p116 = por %p114, %p115
      %p117 = scmp.le.s32.totalorder 1, %s15
      %p118 = scmp.lt.s32.totalorder %s15, 9
      %p119 = pnand %p117, %p118
      %p120 = pneg %p119
      // Predicated region
      $region9: #{tpu_custom_call.1} parent=5 // pred_check
        _
      $region10: #{tpu_custom_call.1} parent=5 // pred_check_branch
        %122 = sbr.rel (%p119) target = $region12
      $region11: #{tpu_custom_call.1} parent=5 // pred_region
        %s123 = ssub.s32 %s15, 1
        // Predicated region
        $region13: #{tpu_custom_call.1} parent=11 // pred_check
          %p124 = pneg %p62
        $region14: #{tpu_custom_call.1} parent=11 // pred_check_branch
          %126 = sbr.rel (%p124) target = $region16
        $region15: #{tpu_custom_call.1} parent=11 // pred_region
          _
        $region16: #{tpu_custom_call.1} parent=11 // pred_fallthru
          _
        // Predicated region
        $region17: #{tpu_custom_call.1} parent=11 // pred_check
          %p127 = pneg %p83
        $region18: #{tpu_custom_call.1} parent=11 // pred_check_branch
          %129 = sbr.rel (%p127) target = $region20
        $region19: #{tpu_custom_call.1} parent=11 // pred_region
          _
        $region20: #{tpu_custom_call.1} parent=11 // pred_fallthru
          _
      $region12: #{tpu_custom_call.1} parent=5 // pred_fallthru
        _
      %p130 = scmp.lt.s32.totalorder %s15, 8
      // Predicated region
      $region21: #{tpu_custom_call.1} parent=5 // pred_check
        %p131 = pneg %p130
      $region22: #{tpu_custom_call.1} parent=5 // pred_check_branch
        %133 = sbr.rel (%p131) target = $region24
      $region23: #{tpu_custom_call.1} parent=5 // pred_region
        // Predicated region
        $region25: #{tpu_custom_call.1} parent=23 // pred_check
          %p134 = pneg %p35
        $region26: #{tpu_custom_call.1} parent=23 // pred_check_branch
          %136 = sbr.rel (%p134) target = $region28
        $region27: #{tpu_custom_call.1} parent=23 // pred_region
          %s137 = sand.u32 %s25, 1
          %s138 = scalar_lea.sflag [#allocation3], %s137
          %s139 = sand.u32 %s25, 1
          %s140 = smul.addr %s139, 16
          %s141 = scalar_lea.vmem [#allocation2], %s140
          %s142 = smul.u32 4, %s15
          %s144 = ssub.s32 256, 256
          %145 = vsyncadd %s138, %s144
          %s146 = smul.addr %s142, 64
          %s147 = scalar_lea.hbm %s0, %s146
          %s149 = sshll.u32 %s141, 4
          %s150 = int_to_ptr.vmem [resolvable:$true] %s149
          %152 = dma.hbm_to_vmem [thread:$0]  %s147, 256, %s150, %s138
        $region28: #{tpu_custom_call.1} parent=23 // pred_fallthru
          _
      $region24: #{tpu_custom_call.1} parent=5 // pred_fallthru
        _
      %p153 = scmp.le.s32.totalorder 1, %s15
      %p154 = scmp.lt.s32.totalorder %s15, 9
      %p155 = pnand %p153, %p154
      %p156 = pneg %p155
      // Predicated region
      $region29: #{tpu_custom_call.1} parent=5 // pred_check
        _
      $region30: #{tpu_custom_call.1} parent=5 // pred_check_branch
        %158 = sbr.rel (%p155) target = $region32
      $region31: #{tpu_custom_call.1} parent=5 // pred_region
        %s159 = ssub.s32 %s15, 1
        %s160 = sand.u32 %s28, 1
        %s161 = scalar_lea.sflag [#allocation3], %s160
        %s162 = sand.u32 %s28, 1
        %s163 = smul.addr %s162, 16
        %s164 = scalar_lea.vmem [#allocation2], %s163
        // Predicated region
        $region33: #{tpu_custom_call.1} parent=31 // pred_check
          %p165 = pneg %p41
        $region34: #{tpu_custom_call.1} parent=31 // pred_check_branch
          %167 = sbr.rel (%p165) target = $region36
        $region35: #{tpu_custom_call.1} parent=31 // pred_region
          %168 = dma.done %s161, 256
        $region36: #{tpu_custom_call.1} parent=31 // pred_fallthru
          _
        %s169 = sand.u32 %s28, 1
        %s170 = scalar_lea.sflag [#allocation3], %s169
        %s171 = sand.u32 %s28, 1
        %s172 = smul.addr %s171, 16
        %s173 = scalar_lea.vmem [#allocation2], %s172
        %p174 = pneg %p41
        %p175 = pneg %p38
        %p176 = pneg %p62
        %p177 = pneg %p59
        %p178 = pneg %p83
        %p179 = pneg %p80
        %p180 = pneg %p109
        %p181 = pneg %p106
        %s182 = sand.u32 %s96, 1
        %s183 = scalar_lea.sflag [#allocation4], %s182
        %s184 = sand.u32 %s96, 1
        %s185 = smul.addr %s184, 4
        %s186 = scalar_lea.vmem [#allocation5], %s185
        %s187 = smul.u32 4, %s20
        %s188 = smul.u32 4, %s20
        %v189 = vld [vmem:[%s164] sm:$0x77]
        %v190 = vld [vmem:[%s164 + $0x8] sm:$0x77]
        %v191 = vadd.f32 %v189, 1.0
        %v192 = vadd.f32 %v190, 1.0
        %v193 = vmul.f32 %v191, 7.5
        %v194 = vmul.f32 %v192, 7.5
        %v195 = vmax.f32 %v193, 0.0
        %v196 = vmax.f32 %v194, 0.0
        %v197 = vmin.f32 %v195, 15.0
        %v198 = vmin.f32 %v196, 15.0
        %v199 = vlaneseq
        %v200 = vshrl.u32 %v199, 7
        %v201 = vadd.s32 %v200, 8
        %v202 = vcvt.s32.f32 %v200
        %v203 = vcvt.s32.f32 %v201
        %v206 = vlaneseq
        %v207 = vshrl.u32 %v206, 7
        %v208 = vsub.s32 0, %v207
        %v209 = vrot.slane %v197, %v208
        %v210 = vlaneseq
        %v211 = vshrl.u32 %v210, 7
        %v212 = vsub.s32 4, %v211
        %v213 = vrot.slane %v197, %v212
        %v214 = vlaneseq
        %v215 = vshrl.u32 %v214, 7
        %v216 = vsub.s32 0, %v215
        %v217 = vrot.slane %v198, %v216
        %v218 = vlaneseq
        %v219 = vshrl.u32 %v218, 7
        %v220 = vsub.s32 4, %v219
        %v221 = vrot.slane %v198, %v220
        %v226 = vlaneseq
        %v227 = vshrl.u32 %v226, 7
        %v228 = vsub.s32 0, %v227
        %v229 = vrot.slane %v209, %v228
        %v230 = vlaneseq
        %v231 = vshrl.u32 %v230, 7
        %v232 = vsub.s32 0, %v231
        %v233 = vrot.slane %v213, %v232
        %v234 = vlaneseq
        %v235 = vshrl.u32 %v234, 7
        %v236 = vsub.s32 0, %v235
        %v237 = vrot.slane %v217, %v236
        %v238 = vlaneseq
        %v239 = vshrl.u32 %v238, 7
        %v240 = vsub.s32 0, %v239
        %v241 = vrot.slane %v221, %v240
        %v242 = vsub.f32 %v202, %v229
        %v243 = vsub.f32 %v202, %v233
        %v244 = vsub.f32 %v202, %v237
        %v245 = vsub.f32 %v202, %v241
        %v246 = vsub.f32 %v203, %v229
        %v247 = vsub.f32 %v203, %v233
        %v248 = vsub.f32 %v203, %v237
        %v249 = vsub.f32 %v203, %v241
        %v250 = vand.u32 2147483647, %v242
        %v251 = vand.u32 2147483647, %v243
        %v252 = vand.u32 2147483647, %v244
        %v253 = vand.u32 2147483647, %v245
        %v254 = vand.u32 2147483647, %v246
        %v255 = vand.u32 2147483647, %v247
        %v256 = vand.u32 2147483647, %v248
        %v257 = vand.u32 2147483647, %v249
        %v258 = vsub.f32 1.0, %v250
        %v259 = vsub.f32 1.0, %v251
        %v260 = vsub.f32 1.0, %v252
        %v261 = vsub.f32 1.0, %v253
        %v262 = vsub.f32 1.0, %v254
        %v263 = vsub.f32 1.0, %v255
        %v264 = vsub.f32 1.0, %v256
        %v265 = vsub.f32 1.0, %v257
        %v266 = vmax.f32 %v258, 0.0
        %v267 = vmax.f32 %v259, 0.0
        %v268 = vmax.f32 %v260, 0.0
        %v269 = vmax.f32 %v261, 0.0
        %v270 = vmax.f32 %v262, 0.0
        %v271 = vmax.f32 %v263, 0.0
        %v272 = vmax.f32 %v264, 0.0
        %v273 = vmax.f32 %v265, 0.0
        %v274 = vlaneseq
        %v275 = vshrl.u32 %v274, 7
        %v276 = vsub.s32 1, %v275
        %v277 = vrot.slane %v197, %v276
        %v278 = vlaneseq
        %v279 = vshrl.u32 %v278, 7
        %v280 = vsub.s32 5, %v279
        %v281 = vrot.slane %v197, %v280
        %v282 = vlaneseq
        %v283 = vshrl.u32 %v282, 7
        %v284 = vsub.s32 1, %v283
        %v285 = vrot.slane %v198, %v284
        %v286 = vlaneseq
        %v287 = vshrl.u32 %v286, 7
        %v288 = vsub.s32 5, %v287
        %v289 = vrot.slane %v198, %v288
        %v294 = vlaneseq
        %v295 = vshrl.u32 %v294, 7
        %v296 = vsub.s32 1, %v295
        %v297 = vrot.slane %v277, %v296
        %v298 = vlaneseq
        %v299 = vshrl.u32 %v298, 7
        %v300 = vsub.s32 1, %v299
        %v301 = vrot.slane %v281, %v300
        %v302 = vlaneseq
        %v303 = vshrl.u32 %v302, 7
        %v304 = vsub.s32 1, %v303
        %v305 = vrot.slane %v285, %v304
        %v306 = vlaneseq
        %v307 = vshrl.u32 %v306, 7
        %v308 = vsub.s32 1, %v307
        %v309 = vrot.slane %v289, %v308
        %v310 = vsub.f32 %v202, %v297
        %v311 = vsub.f32 %v202, %v301
        %v312 = vsub.f32 %v202, %v305
        %v313 = vsub.f32 %v202, %v309
        %v314 = vsub.f32 %v203, %v297
        %v315 = vsub.f32 %v203, %v301
        %v316 = vsub.f32 %v203, %v305
        %v317 = vsub.f32 %v203, %v309
        %v318 = vand.u32 2147483647, %v310
        %v319 = vand.u32 2147483647, %v311
        %v320 = vand.u32 2147483647, %v312
        %v321 = vand.u32 2147483647, %v313
        %v322 = vand.u32 2147483647, %v314
        %v323 = vand.u32 2147483647, %v315
        %v324 = vand.u32 2147483647, %v316
        %v325 = vand.u32 2147483647, %v317
        %v326 = vsub.f32 1.0, %v318
        %v327 = vsub.f32 1.0, %v319
        %v328 = vsub.f32 1.0, %v320
        %v329 = vsub.f32 1.0, %v321
        %v330 = vsub.f32 1.0, %v322
        %v331 = vsub.f32 1.0, %v323
        %v332 = vsub.f32 1.0, %v324
        %v333 = vsub.f32 1.0, %v325
        %v334 = vmax.f32 %v326, 0.0
        %v335 = vmax.f32 %v327, 0.0
        %v336 = vmax.f32 %v328, 0.0
        %v337 = vmax.f32 %v329, 0.0
        %v338 = vmax.f32 %v330, 0.0
        %v339 = vmax.f32 %v331, 0.0
        %v340 = vmax.f32 %v332, 0.0
        %v341 = vmax.f32 %v333, 0.0
        %v342 = vlaneseq
        %v343 = vshrl.u32 %v342, 7
        %v344 = vsub.s32 2, %v343
        %v345 = vrot.slane %v197, %v344
        %v346 = vlaneseq
        %v347 = vshrl.u32 %v346, 7
        %v348 = vsub.s32 6, %v347
        %v349 = vrot.slane %v197, %v348
        %v350 = vlaneseq
        %v351 = vshrl.u32 %v350, 7
        %v352 = vsub.s32 2, %v351
        %v353 = vrot.slane %v198, %v352
        %v354 = vlaneseq
        %v355 = vshrl.u32 %v354, 7
        %v356 = vsub.s32 6, %v355
        %v357 = vrot.slane %v198, %v356
        %v362 = vlaneseq
        %v363 = vshrl.u32 %v362, 7
        %v364 = vsub.s32 2, %v363
        %v365 = vrot.slane %v345, %v364
        %v366 = vlaneseq
        %v367 = vshrl.u32 %v366, 7
        %v368 = vsub.s32 2, %v367
        %v369 = vrot.slane %v349, %v368
        %v370 = vlaneseq
        %v371 = vshrl.u32 %v370, 7
        %v372 = vsub.s32 2, %v371
        %v373 = vrot.slane %v353, %v372
        %v374 = vlaneseq
        %v375 = vshrl.u32 %v374, 7
        %v376 = vsub.s32 2, %v375
        %v377 = vrot.slane %v357, %v376
        %v378 = vsub.f32 %v202, %v365
        %v379 = vsub.f32 %v202, %v369
        %v380 = vsub.f32 %v202, %v373
        %v381 = vsub.f32 %v202, %v377
        %v382 = vsub.f32 %v203, %v365
        %v383 = vsub.f32 %v203, %v369
        %v384 = vsub.f32 %v203, %v373
        %v385 = vsub.f32 %v203, %v377
        %v386 = vand.u32 2147483647, %v378
        %v387 = vand.u32 2147483647, %v379
        %v388 = vand.u32 2147483647, %v380
        %v389 = vand.u32 2147483647, %v381
        %v390 = vand.u32 2147483647, %v382
        %v391 = vand.u32 2147483647, %v383
        %v392 = vand.u32 2147483647, %v384
        %v393 = vand.u32 2147483647, %v385
        %v394 = vsub.f32 1.0, %v386
        %v395 = vsub.f32 1.0, %v387
        %v396 = vsub.f32 1.0, %v388
        %v397 = vsub.f32 1.0, %v389
        %v398 = vsub.f32 1.0, %v390
        %v399 = vsub.f32 1.0, %v391
        %v400 = vsub.f32 1.0, %v392
        %v401 = vsub.f32 1.0, %v393
        %v402 = vmax.f32 %v394, 0.0
        %v403 = vmax.f32 %v395, 0.0
        %v404 = vmax.f32 %v396, 0.0
        %v405 = vmax.f32 %v397, 0.0
        %v406 = vmax.f32 %v398, 0.0
        %v407 = vmax.f32 %v399, 0.0
        %v408 = vmax.f32 %v400, 0.0
        %v409 = vmax.f32 %v401, 0.0
        %v410 = vld [vmem:[%s1] sm:$0xff]
        %v411 = vld [vmem:[%s1 + $0x8] sm:$0xff]
        %v412 = vld [vmem:[%s1 + $0x10] sm:$0xff]
        %v413 = vld [vmem:[%s1 + $0x18] sm:$0xff]
        %vm414 = vcmask 130048
        %v416 = vsel %vm414, %v410, 0
        %v419 = vsel %vm414, %v411, 0
        %v422 = vsel %vm414, %v412, 0
        %v425 = vsel %vm414, %v413, 0
        %427 = vmatprep.subr.mxu0 0.0
        %428 = vmatpush1.msra.mxu0 0.0
        %429 = vmatprep.subr.mxu0 0.0
        %430 = vmatpush1.msra.mxu0 0.0
        %431 = vmatprep.subr.mxu0 0.0
        %432 = vmatpush1.msra.mxu0 0.0
        %433 = vmatprep.subr.mxu0 0.0
        %434 = vmatpush1.msra.mxu0 0.0
        %435 = vmatprep.subr.mxu0 0.0
        %436 = vmatpush1.msra.mxu0 0.0
        %437 = vmatprep.subr.mxu0 0.0
        %438 = vmatpush1.msra.mxu0 0.0
        %439 = vmatprep.subr.mxu0 0.0
        %440 = vmatpush1.msra.mxu0 0.0
        %441 = vmatprep.subr.mxu0 0.0
        %442 = vmatpush1.msra.mxu0 0.0
        %443 = vmatprep.subr.mxu0 0.0
        %444 = vmatpush1.msra.mxu0 0.0
        %445 = vmatprep.subr.mxu0 0.0
        %446 = vmatpush1.msra.mxu0 0.0
        %447 = vmatprep.subr.mxu0 0.0
        %448 = vmatpush1.msra.mxu0 0.0
        %449 = vmatprep.subr.mxu0 0.0
        %450 = vmatpush1.msra.mxu0 0.0
        %451 = vmatprep.subr.mxu0 0.0
        %452 = vmatpush1.msra.mxu0 0.0
        %453 = vmatprep.subr.mxu0 0.0
        %454 = vmatpush1.msra.mxu0 0.0
        %455 = vmatprep.subr.mxu0 %v271
        %456 = vmatpush1.msra.mxu0 %v270
        %457 = vmatprep.subr.mxu0 %v267
        %458 = vmatpush1.msra.mxu0 %v266
        %459 = vmatprep.subr.mxu0 0.0
        %460 = vmatpush2.msra.mxu0 0.0
        %461 = vmatprep.subr.mxu0 0.0
        %462 = vmatpush2.msra.mxu0 0.0
        %463 = vmatprep.subr.mxu0 0.0
        %464 = vmatpush2.msra.mxu0 0.0
        %465 = vmatprep.subr.mxu0 0.0
        %466 = vmatpush2.msra.mxu0 0.0
        %467 = vmatprep.subr.mxu0 0.0
        %468 = vmatpush2.msra.mxu0 0.0
        %469 = vmatprep.subr.mxu0 0.0
        %470 = vmatpush2.msra.mxu0 0.0
        %471 = vmatprep.subr.mxu0 0.0
        %472 = vmatpush2.msra.mxu0 0.0
        %473 = vmatprep.subr.mxu0 0.0
        %474 = vmatpush2.msra.mxu0 0.0
        %475 = vmatprep.subr.mxu0 0.0
        %476 = vmatpush2.msra.mxu0 0.0
        %477 = vmatprep.subr.mxu0 0.0
        %478 = vmatpush2.msra.mxu0 0.0
        %479 = vmatprep.subr.mxu0 0.0
        %480 = vmatpush2.msra.mxu0 0.0
        %481 = vmatprep.subr.mxu0 0.0
        %482 = vmatpush2.msra.mxu0 0.0
        %483 = vmatprep.subr.mxu0 0.0
        %484 = vmatpush2.msra.mxu0 0.0
        %485 = vmatprep.subr.mxu0 0.0
        %486 = vmatpush2.msra.mxu0 0.0
        %487 = vmatprep.subr.mxu0 0.0
        %488 = vmatpush2.msra.mxu0 0.0
        %489 = vmatprep.subr.mxu0 0.0
        %490 = vmatpush2.msra.mxu0 0.0
        %491 = vmatprep.mubr.f32.mxu0 0.0
        %492 = vmatmul.mubr.f32.gmra.mxu0 %v416
        %v493 = vpop.f32.mrf.mxu0
        %v494 = vadd.f32 0.0, %v493
        %v495 = vpop.f32.mrf.mxu0
        %v496 = vadd.f32 0.0, %v495
        %497 = vmatprep.mubr.f32.mxu0 0.0
        %498 = vmatmul.mubr.f32.gmra.mxu0 %v419
        %v499 = vpop.f32.mrf.mxu0
        %v500 = vadd.f32 0.0, %v499
        %v501 = vpop.f32.mrf.mxu0
        %v502 = vadd.f32 0.0, %v501
        %503 = vmatprep.mubr.f32.mxu0 0.0
        %504 = vmatmul.mubr.f32.gmra.mxu0 %v422
        %v505 = vpop.f32.mrf.mxu0
        %v506 = vadd.f32 0.0, %v505
        %v507 = vpop.f32.mrf.mxu0
        %v508 = vadd.f32 0.0, %v507
        %509 = vmatprep.mubr.f32.mxu0 0.0
        %510 = vmatmul.mubr.f32.gmra.mxu0 %v425
        %v511 = vpop.f32.mrf.mxu0
        %v512 = vadd.f32 0.0, %v511
        %v513 = vpop.f32.mrf.mxu0
        %v514 = vadd.f32 0.0, %v513
        %515 = vdwg.mxu0
        %516 = vmatprep.subr.mxu0 0.0
        %517 = vmatpush1.msra.mxu0 0.0
        %518 = vmatprep.subr.mxu0 0.0
        %519 = vmatpush1.msra.mxu0 0.0
        %520 = vmatprep.subr.mxu0 0.0
        %521 = vmatpush1.msra.mxu0 0.0
        %522 = vmatprep.subr.mxu0 0.0
        %523 = vmatpush1.msra.mxu0 0.0
        %524 = vmatprep.subr.mxu0 0.0
        %525 = vmatpush1.msra.mxu0 0.0
        %526 = vmatprep.subr.mxu0 0.0
        %527 = vmatpush1.msra.mxu0 0.0
        %528 = vmatprep.subr.mxu0 0.0
        %529 = vmatpush1.msra.mxu0 0.0
        %530 = vmatprep.subr.mxu0 0.0
        %531 = vmatpush1.msra.mxu0 0.0
        %532 = vmatprep.subr.mxu0 0.0
        %533 = vmatpush1.msra.mxu0 0.0
        %534 = vmatprep.subr.mxu0 0.0
        %535 = vmatpush1.msra.mxu0 0.0
        %536 = vmatprep.subr.mxu0 0.0
        %537 = vmatpush1.msra.mxu0 0.0
        %538 = vmatprep.subr.mxu0 0.0
        %539 = vmatpush1.msra.mxu0 0.0
        %540 = vmatprep.subr.mxu0 0.0
        %541 = vmatpush1.msra.mxu0 0.0
        %542 = vmatprep.subr.mxu0 0.0
        %543 = vmatpush1.msra.mxu0 0.0
        %544 = vmatprep.subr.mxu0 %v273
        %545 = vmatpush1.msra.mxu0 %v272
        %546 = vmatprep.subr.mxu0 %v269
        %547 = vmatpush1.msra.mxu0 %v268
        %548 = vmatprep.subr.mxu0 0.0
        %549 = vmatpush2.msra.mxu0 0.0
        %550 = vmatprep.subr.mxu0 0.0
        %551 = vmatpush2.msra.mxu0 0.0
        %552 = vmatprep.subr.mxu0 0.0
        %553 = vmatpush2.msra.mxu0 0.0
        %554 = vmatprep.subr.mxu0 0.0
        %555 = vmatpush2.msra.mxu0 0.0
        %556 = vmatprep.subr.mxu0 0.0
        %557 = vmatpush2.msra.mxu0 0.0
        %558 = vmatprep.subr.mxu0 0.0
        %559 = vmatpush2.msra.mxu0 0.0
        %560 = vmatprep.subr.mxu0 0.0
        %561 = vmatpush2.msra.mxu0 0.0
        %562 = vmatprep.subr.mxu0 0.0
        %563 = vmatpush2.msra.mxu0 0.0
        %564 = vmatprep.subr.mxu0 0.0
        %565 = vmatpush2.msra.mxu0 0.0
        %566 = vmatprep.subr.mxu0 0.0
        %567 = vmatpush2.msra.mxu0 0.0
        %568 = vmatprep.subr.mxu0 0.0
        %569 = vmatpush2.msra.mxu0 0.0
        %570 = vmatprep.subr.mxu0 0.0
        %571 = vmatpush2.msra.mxu0 0.0
        %572 = vmatprep.subr.mxu0 0.0
        %573 = vmatpush2.msra.mxu0 0.0
        %574 = vmatprep.subr.mxu0 0.0
        %575 = vmatpush2.msra.mxu0 0.0
        %576 = vmatprep.subr.mxu0 0.0
        %577 = vmatpush2.msra.mxu0 0.0
        %578 = vmatprep.subr.mxu0 0.0
        %579 = vmatpush2.msra.mxu0 0.0
        %580 = vmatprep.mubr.f32.mxu0 0.0
        %581 = vmatmul.mubr.f32.gmra.mxu0 %v416
        %v582 = vpop.f32.mrf.mxu0
        %v583 = vadd.f32 0.0, %v582
        %v584 = vpop.f32.mrf.mxu0
        %v585 = vadd.f32 0.0, %v584
        %586 = vmatprep.mubr.f32.mxu0 0.0
        %587 = vmatmul.mubr.f32.gmra.mxu0 %v419
        %v588 = vpop.f32.mrf.mxu0
        %v589 = vadd.f32 0.0, %v588
        %v590 = vpop.f32.mrf.mxu0
        %v591 = vadd.f32 0.0, %v590
        %592 = vmatprep.mubr.f32.mxu0 0.0
        %593 = vmatmul.mubr.f32.gmra.mxu0 %v422
        %v594 = vpop.f32.mrf.mxu0
        %v595 = vadd.f32 0.0, %v594
        %v596 = vpop.f32.mrf.mxu0
        %v597 = vadd.f32 0.0, %v596
        %598 = vmatprep.mubr.f32.mxu0 0.0
        %599 = vmatmul.mubr.f32.gmra.mxu0 %v425
        %v600 = vpop.f32.mrf.mxu0
        %v601 = vadd.f32 0.0, %v600
        %v602 = vpop.f32.mrf.mxu0
        %v603 = vadd.f32 0.0, %v602
        %604 = vdwg.mxu0
        %v605 = vld [vmem:[%s2] sm:$0xff]
        %v606 = vld [vmem:[%s2 + $0x8] sm:$0xff]
        %v608 = vsel %vm414, %v605, 0
        %v611 = vsel %vm414, %v606, 0
        %613 = vmatprep.subr.mxu0 0.0
        %614 = vmatpush1.msra.mxu0 0.0
        %615 = vmatprep.subr.mxu0 0.0
        %616 = vmatpush1.msra.mxu0 0.0
        %617 = vmatprep.subr.mxu0 0.0
        %618 = vmatpush1.msra.mxu0 0.0
        %619 = vmatprep.subr.mxu0 0.0
        %620 = vmatpush1.msra.mxu0 0.0
        %621 = vmatprep.subr.mxu0 0.0
        %622 = vmatpush1.msra.mxu0 0.0
        %623 = vmatprep.subr.mxu0 0.0
        %624 = vmatpush1.msra.mxu0 0.0
        %625 = vmatprep.subr.mxu0 0.0
        %626 = vmatpush1.msra.mxu0 0.0
        %627 = vmatprep.subr.mxu0 0.0
        %628 = vmatpush1.msra.mxu0 0.0
        %629 = vmatprep.subr.mxu0 0.0
        %630 = vmatpush1.msra.mxu0 0.0
        %631 = vmatprep.subr.mxu0 0.0
        %632 = vmatpush1.msra.mxu0 0.0
        %633 = vmatprep.subr.mxu0 0.0
        %634 = vmatpush1.msra.mxu0 0.0
        %635 = vmatprep.subr.mxu0 0.0
        %636 = vmatpush1.msra.mxu0 0.0
        %637 = vmatprep.subr.mxu0 0.0
        %638 = vmatpush1.msra.mxu0 0.0
        %639 = vmatprep.subr.mxu0 0.0
        %640 = vmatpush1.msra.mxu0 0.0
        %641 = vmatprep.subr.mxu0 %v339
        %642 = vmatpush1.msra.mxu0 %v338
        %643 = vmatprep.subr.mxu0 %v335
        %644 = vmatpush1.msra.mxu0 %v334
        %645 = vmatprep.subr.mxu0 0.0
        %646 = vmatpush2.msra.mxu0 0.0
        %647 = vmatprep.subr.mxu0 0.0
        %648 = vmatpush2.msra.mxu0 0.0
        %649 = vmatprep.subr.mxu0 0.0
        %650 = vmatpush2.msra.mxu0 0.0
        %651 = vmatprep.subr.mxu0 0.0
        %652 = vmatpush2.msra.mxu0 0.0
        %653 = vmatprep.subr.mxu0 0.0
        %654 = vmatpush2.msra.mxu0 0.0
        %655 = vmatprep.subr.mxu0 0.0
        %656 = vmatpush2.msra.mxu0 0.0
        %657 = vmatprep.subr.mxu0 0.0
        %658 = vmatpush2.msra.mxu0 0.0
        %659 = vmatprep.subr.mxu0 0.0
        %660 = vmatpush2.msra.mxu0 0.0
        %661 = vmatprep.subr.mxu0 0.0
        %662 = vmatpush2.msra.mxu0 0.0
        %663 = vmatprep.subr.mxu0 0.0
        %664 = vmatpush2.msra.mxu0 0.0
        %665 = vmatprep.subr.mxu0 0.0
        %666 = vmatpush2.msra.mxu0 0.0
        %667 = vmatprep.subr.mxu0 0.0
        %668 = vmatpush2.msra.mxu0 0.0
        %669 = vmatprep.subr.mxu0 0.0
        %670 = vmatpush2.msra.mxu0 0.0
        %671 = vmatprep.subr.mxu0 0.0
        %672 = vmatpush2.msra.mxu0 0.0
        %673 = vmatprep.subr.mxu0 0.0
        %674 = vmatpush2.msra.mxu0 0.0
        %675 = vmatprep.subr.mxu0 0.0
        %676 = vmatpush2.msra.mxu0 0.0
        %677 = vmatprep.mubr.f32.mxu0 0.0
        %678 = vmatmul.mubr.f32.gmra.mxu0 %v608
        %v679 = vpop.f32.mrf.mxu0
        %v680 = vadd.f32 0.0, %v679
        %v681 = vpop.f32.mrf.mxu0
        %v682 = vadd.f32 0.0, %v681
        %683 = vmatprep.mubr.f32.mxu0 0.0
        %684 = vmatmul.mubr.f32.gmra.mxu0 %v611
        %v685 = vpop.f32.mrf.mxu0
        %v686 = vadd.f32 0.0, %v685
        %v687 = vpop.f32.mrf.mxu0
        %v688 = vadd.f32 0.0, %v687
        %689 = vdwg.mxu0
        %690 = vmatprep.subr.mxu0 0.0
        %691 = vmatpush1.msra.mxu0 0.0
        %692 = vmatprep.subr.mxu0 0.0
        %693 = vmatpush1.msra.mxu0 0.0
        %694 = vmatprep.subr.mxu0 0.0
        %695 = vmatpush1.msra.mxu0 0.0
        %696 = vmatprep.subr.mxu0 0.0
        %697 = vmatpush1.msra.mxu0 0.0
        %698 = vmatprep.subr.mxu0 0.0
        %699 = vmatpush1.msra.mxu0 0.0
        %700 = vmatprep.subr.mxu0 0.0
        %701 = vmatpush1.msra.mxu0 0.0
        %702 = vmatprep.subr.mxu0 0.0
        %703 = vmatpush1.msra.mxu0 0.0
        %704 = vmatprep.subr.mxu0 0.0
        %705 = vmatpush1.msra.mxu0 0.0
        %706 = vmatprep.subr.mxu0 0.0
        %707 = vmatpush1.msra.mxu0 0.0
        %708 = vmatprep.subr.mxu0 0.0
        %709 = vmatpush1.msra.mxu0 0.0
        %710 = vmatprep.subr.mxu0 0.0
        %711 = vmatpush1.msra.mxu0 0.0
        %712 = vmatprep.subr.mxu0 0.0
        %713 = vmatpush1.msra.mxu0 0.0
        %714 = vmatprep.subr.mxu0 0.0
        %715 = vmatpush1.msra.mxu0 0.0
        %716 = vmatprep.subr.mxu0 0.0
        %717 = vmatpush1.msra.mxu0 0.0
        %718 = vmatprep.subr.mxu0 %v341
        %719 = vmatpush1.msra.mxu0 %v340
        %720 = vmatprep.subr.mxu0 %v337
        %721 = vmatpush1.msra.mxu0 %v336
        %722 = vmatprep.subr.mxu0 0.0
        %723 = vmatpush2.msra.mxu0 0.0
        %724 = vmatprep.subr.mxu0 0.0
        %725 = vmatpush2.msra.mxu0 0.0
        %726 = vmatprep.subr.mxu0 0.0
        %727 = vmatpush2.msra.mxu0 0.0
        %728 = vmatprep.subr.mxu0 0.0
        %729 = vmatpush2.msra.mxu0 0.0
        %730 = vmatprep.subr.mxu0 0.0
        %731 = vmatpush2.msra.mxu0 0.0
        %732 = vmatprep.subr.mxu0 0.0
        %733 = vmatpush2.msra.mxu0 0.0
        %734 = vmatprep.subr.mxu0 0.0
        %735 = vmatpush2.msra.mxu0 0.0
        %736 = vmatprep.subr.mxu0 0.0
        %737 = vmatpush2.msra.mxu0 0.0
        %738 = vmatprep.subr.mxu0 0.0
        %739 = vmatpush2.msra.mxu0 0.0
        %740 = vmatprep.subr.mxu0 0.0
        %741 = vmatpush2.msra.mxu0 0.0
        %742 = vmatprep.subr.mxu0 0.0
        %743 = vmatpush2.msra.mxu0 0.0
        %744 = vmatprep.subr.mxu0 0.0
        %745 = vmatpush2.msra.mxu0 0.0
        %746 = vmatprep.subr.mxu0 0.0
        %747 = vmatpush2.msra.mxu0 0.0
        %748 = vmatprep.subr.mxu0 0.0
        %749 = vmatpush2.msra.mxu0 0.0
        %750 = vmatprep.subr.mxu0 0.0
        %751 = vmatpush2.msra.mxu0 0.0
        %752 = vmatprep.subr.mxu0 0.0
        %753 = vmatpush2.msra.mxu0 0.0
        %754 = vmatprep.mubr.f32.mxu0 0.0
        %755 = vmatmul.mubr.f32.gmra.mxu0 %v608
        %v756 = vpop.f32.mrf.mxu0
        %v757 = vadd.f32 0.0, %v756
        %v758 = vpop.f32.mrf.mxu0
        %v759 = vadd.f32 0.0, %v758
        %760 = vmatprep.mubr.f32.mxu0 0.0
        %761 = vmatmul.mubr.f32.gmra.mxu0 %v611
        %v762 = vpop.f32.mrf.mxu0
        %v763 = vadd.f32 0.0, %v762
        %v764 = vpop.f32.mrf.mxu0
        %v765 = vadd.f32 0.0, %v764
        %766 = vdwg.mxu0
        %v767 = vmul.f32 %v494, %v334
        %v768 = vmul.f32 %v496, %v335
        %v769 = vmul.f32 %v583, %v336
        %v770 = vmul.f32 %v585, %v337
        %v771 = vmul.f32 %v500, %v338
        %v772 = vmul.f32 %v502, %v339
        %v773 = vmul.f32 %v589, %v340
        %v774 = vmul.f32 %v591, %v341
        %v775 = vadd.f32 %v506, %v680
        %v776 = vadd.f32 %v508, %v682
        %v777 = vadd.f32 %v595, %v757
        %v778 = vadd.f32 %v597, %v759
        %v779 = vadd.f32 %v512, %v686
        %v780 = vadd.f32 %v514, %v688
        %v781 = vadd.f32 %v601, %v763
        %v782 = vadd.f32 %v603, %v765
        %v783 = vmul.f32 %v775, %v402
        %v784 = vmul.f32 %v776, %v403
        %v785 = vmul.f32 %v777, %v404
        %v786 = vmul.f32 %v778, %v405
        %v787 = vmul.f32 %v779, %v406
        %v788 = vmul.f32 %v780, %v407
        %v789 = vmul.f32 %v781, %v408
        %v790 = vmul.f32 %v782, %v409
        %v791 = vadd.f32 %v767, %v783
        %v792 = vadd.f32 %v768, %v784
        %v793 = vadd.f32 %v769, %v785
        %v794 = vadd.f32 %v770, %v786
        %v795 = vadd.f32 %v771, %v787
        %v796 = vadd.f32 %v772, %v788
        %v797 = vadd.f32 %v773, %v789
        %v798 = vadd.f32 %v774, %v790
        %v799 = vadd.f32 %v791, %v795
        %v800 = vrot.slane %v799, 4
        %v801 = vadd.f32 %v799, %v800
        %v802 = vrot.slane %v801, 2
        %v803 = vadd.f32 %v801, %v802
        %v804 = vrot.slane %v803, 1
        %v805 = vadd.f32 %v803, %v804
        %v806 = vadd.f32 %v792, %v796
        %v807 = vrot.slane %v806, 4
        %v808 = vadd.f32 %v806, %v807
        %v809 = vrot.slane %v808, 2
        %v810 = vadd.f32 %v808, %v809
        %v811 = vrot.slane %v810, 1
        %v812 = vadd.f32 %v810, %v811
        %v813 = vadd.f32 %v793, %v797
        %v814 = vrot.slane %v813, 4
        %v815 = vadd.f32 %v813, %v814
        %v816 = vrot.slane %v815, 2
        %v817 = vadd.f32 %v815, %v816
        %v818 = vrot.slane %v817, 1
        %v819 = vadd.f32 %v817, %v818
        %v820 = vadd.f32 %v794, %v798
        %v821 = vrot.slane %v820, 4
        %v822 = vadd.f32 %v820, %v821
        %v823 = vrot.slane %v822, 2
        %v824 = vadd.f32 %v822, %v823
        %v825 = vrot.slane %v824, 1
        %v826 = vadd.f32 %v824, %v825
        %v831 = vcombine.low %v805, %v812
        %v832 = vcombine.low %v819, %v826
        %v834 = vunpack.c.l.s4 1966171168
        %v835 = vunpack.c.0.s8 %v834
        %v836 = vlaneseq
        %v837 = vshrl.u32 %v836, 7
        %v838 = vsub.s32 %v835, %v837
        %v839 = vrot.slane %v831, %v838
        %v841 = vunpack.c.l.s4 1966171168
        %v842 = vunpack.c.0.s8 %v841
        %v843 = vlaneseq
        %v844 = vshrl.u32 %v843, 7
        %v845 = vsub.s32 %v842, %v844
        %v846 = vrot.slane %v832, %v845
        %v847 = vcombine.low %v839, %v846
        %v849 = vunpack.c.l.s4 1966171168
        %v850 = vunpack.c.0.s8 %v849
        %v851 = vlaneseq
        %v852 = vshrl.u32 %v851, 7
        %v853 = vsub.s32 %v850, %v852
        %v854 = vrot.slane %v847, %v853
        %v856 = vlaneseq
        %vm857 = vcmp.ge.s32.totalorder %v856, 0
        %vm858 = vcmp.lt.s32.totalorder %v856, 512
        %vm859 = vmand %vm857, %vm858
        %860 = vst.msk [vmem:[%s186] sm:$0xf] %vm859, %v854
        %s861 = sand.u32 %s96, 1
        %s862 = scalar_lea.sflag [#allocation4], %s861
        %s863 = sand.u32 %s96, 1
        %s864 = smul.addr %s863, 4
        %s865 = scalar_lea.vmem [#allocation5], %s864
        // Predicated region
        $region37: #{tpu_custom_call.1} parent=31 // pred_check
          %p866 = pneg %p106
        $region38: #{tpu_custom_call.1} parent=31 // pred_check_branch
          %868 = sbr.rel (%p866) target = $region40
        $region39: #{tpu_custom_call.1} parent=31 // pred_region
          %s869 = smul.u32 4, %s20
          %s871 = ssub.s32 64, 64
          %872 = vsyncadd %s862, %s871
          %s873 = smul.addr %s869, 16
          %s874 = scalar_lea.hbm %s3, %s873
          %s876 = sshll.u32 %s865, 4
          %s877 = int_to_ptr.vmem [resolvable:$true] %s876
          %879 = dma.vmem_to_hbm [thread:$0]  %s877, 64, %s874, %s862
        $region40: #{tpu_custom_call.1} parent=31 // pred_fallthru
          _
      $region32: #{tpu_custom_call.1} parent=5 // pred_fallthru
        _
      %p880 = scmp.le.s32.totalorder 2, %s15
      // Predicated region
      $region41: #{tpu_custom_call.1} parent=5 // pred_check
        %p881 = pneg %p880
      $region42: #{tpu_custom_call.1} parent=5 // pred_check_branch
        %883 = sbr.rel (%p881) target = $region44
      $region43: #{tpu_custom_call.1} parent=5 // pred_region
        %s884 = ssub.s32 %s15, 2
        // Predicated region
        $region45: #{tpu_custom_call.1} parent=43 // pred_check
          %p885 = pneg %p112
        $region46: #{tpu_custom_call.1} parent=43 // pred_check_branch
          %887 = sbr.rel (%p885) target = $region48
        $region47: #{tpu_custom_call.1} parent=43 // pred_region
          %s888 = sand.u32 %s97, 1
          %s889 = scalar_lea.sflag [#allocation4], %s888
          %s890 = sand.u32 %s97, 1
          %s891 = smul.addr %s890, 4
          %s892 = scalar_lea.vmem [#allocation5], %s891
          %893 = dma.done %s889, 64
        $region48: #{tpu_custom_call.1} parent=43 // pred_fallthru
          _
      $region44: #{tpu_custom_call.1} parent=5 // pred_fallthru
        _
    $region6: #{tpu_custom_call.1} parent=1 // loop_footer
      %s19 = sadd.s32 1, %s15
    $region7: #{tpu_custom_call.1} parent=1 // loop_footer_branch
      %14 = sbr.rel target = $region3
    $region8: #{tpu_custom_call.1} parent=1 // loop_exit
      _
    %894 = vsyncpa [#allocation3], 1
    %s895 = scalar_lea.sflag [#allocation3], 1
    %896 = vsyncpa %s895, 1
    %897 = vsyncpa [#allocation4], 1
    %s898 = scalar_lea.sflag [#allocation4], 1
    %899 = vsyncpa %s898, 1

</llo_original>
